<compile_context>
chip_gen: v7x
topology: tpu7x:2x2x1
jax: 0.10.0
libtpu: 0.0.40
codegen_flags: <defaults>
</compile_context>

<pallas_src>
import functools
import math

import jax
import jax.numpy as jnp
from jax.experimental import pallas as pl
from jax.experimental.pallas import tpu as pltpu


# ----------------------------------------------------------------------------
# helpers / hardware detection
# ----------------------------------------------------------------------------
def _round_up(x, m):
    return (x + m - 1) // m * m


def _pick_tile(padded, unit=128, max_units=4):
    """Largest multiple of `unit` that divides `padded`, capped at max_units*unit."""
    q = padded // unit
    for d in range(min(max_units, q), 0, -1):
        if q % d == 0:
            return d * unit
    return unit


def _detect_hw():
    kind = ''
    try:
        kind = jax.devices()[0].device_kind.lower()
    except Exception:
        pass
    is_v5e = ('v5' in kind) and (('lite' in kind) or ('v5e' in kind))
    is_v6 = 'v6' in kind
    is_v7 = 'v7' in kind
    num_tc = 2 if is_v7 else 1
    if is_v6:          # 128 MiB VMEM, high roofline ridge -> big tiles
        vmem_limit, tm_cap, max_units = 64 * 2**20, 1024, 8
    elif is_v7:        # 64 MiB VMEM per TensorCore -> cap budget
        vmem_limit, tm_cap, max_units = 48 * 2**20, 512, 4
    elif is_v5e:
        vmem_limit, tm_cap, max_units = 40 * 2**20, 512, 4
    else:              # unknown generation: keep the previously-working defaults
        vmem_limit, tm_cap, max_units = 32 * 2**20, 512, 4
    try:  # refine with the real VMEM capacity when the query is available
        cap = int(getattr(pltpu.get_tpu_info(), 'vmem_capacity_bytes', 0))
        if cap > 0:
            vmem_limit = min(vmem_limit, (cap * 3) // 4)
    except Exception:
        pass
    return {'is_v5e': is_v5e, 'num_tc': num_tc, 'vmem_limit': vmem_limit,
            'tm_cap': tm_cap, 'max_tile_units': max_units,
            'resident_w_bytes': 4 * 2**20}


HW = _detect_hw()
TAP_BLOWUP_CAP = 6.0  # max (padded spatial)/(valid spatial) ratio for the tap kernel

try:  # check pipeline_mode=pl.Buffered availability once (used on v5e only)
    pl.BlockSpec((8, 128), lambda i: (0, 0), pipeline_mode=pl.Buffered(3))
    _HAS_BUFFERED = True
except Exception:
    _HAS_BUFFERED = False


# ----------------------------------------------------------------------------
# Pallas GEMM kernel: tiled over (M, N, K); epilogue fuses BN scale/bias,
# optional residual add, and ReLU; bf16 in / f32 accumulate / bf16 out.
# ----------------------------------------------------------------------------
def _mm_kernel(*refs, relu, has_res):
    if has_res:
        a_ref, w_ref, s_ref, b_ref, r_ref, o_ref, acc_ref = refs
    else:
        a_ref, w_ref, s_ref, b_ref, o_ref, acc_ref = refs
        r_ref = None

    @pl.when(pl.program_id(2) == 0)
    def _():
        acc_ref[...] = jnp.zeros_like(acc_ref)

    acc_ref[...] += jnp.dot(a_ref[...], w_ref[...],
                            preferred_element_type=jnp.float32)

    @pl.when(pl.program_id(2) == pl.num_programs(2) - 1)
    def _():
        y = acc_ref[...] * s_ref[...] + b_ref[...]
        if has_res:
            y = y + r_ref[...].astype(jnp.float32)
        if relu:
            y = jnp.maximum(y, 0.0)
        o_ref[...] = y.astype(o_ref.dtype)


def matmul_fused(a, w_p, s_p, b_p, *, relu=False, residual=None,
                 out_dtype=jnp.bfloat16):
    """y = act((a @ w_p) * scale + bias [+ residual]); returns (M, Np) padded channels."""
    M, K = a.shape
    Kp, Np = w_p.shape
    a = a.astype(jnp.bfloat16)
    if K < Kp:                      # stem 7x7 only (K=147 -> 256): genuine zeros
        a = jnp.pad(a, ((0, 0), (0, Kp - K)))

    tm = min(HW['tm_cap'], _round_up(max(M, 8), 8))
    Mp = _round_up(M, tm)
    if Mp != M:
        a = jnp.pad(a, ((0, Mp - M), (0, 0)))

    has_res = residual is not None
    if has_res:
        r = residual.astype(jnp.bfloat16)
        if Mp != M:
            r = jnp.pad(r, ((0, Mp - M), (0, 0)))

    # weight-resident when it fits comfortably in VMEM -> grid (Mp/tm, 1, 1)
    if Kp * Np * 2 <= HW['resident_w_bytes']:
        tk, tn = Kp, Np
    else:
        tn = _pick_tile(Np, 128, HW['max_tile_units'])
        tk = _pick_tile(Kp, 128, HW['max_tile_units'])

    # guarantee >=2 parallel grid blocks on multi-TensorCore chips (v7x megacore)
    if HW['num_tc'] >= 2 and (Mp // tm) * (Np // tn) < 2:
        if tm >= 16 and tm % 16 == 0:
            tm //= 2
        elif tn >= 256:
            tn //= 2

    k_steps = Kp // tk
    w_kwargs = {}
    if HW['is_v5e'] and _HAS_BUFFERED and k_steps > 1:
        # deepen the weight pipeline over v5e's slower HBM
        w_kwargs['pipeline_mode'] = pl.Buffered(3)

    in_specs = [
        pl.BlockSpec((tm, tk), lambda i, j, k: (i, k)),
        pl.BlockSpec((tk, tn), lambda i, j, k: (k, j), **w_kwargs),
        pl.BlockSpec((1, tn), lambda i, j, k: (0, j)),
        pl.BlockSpec((1, tn), lambda i, j, k: (0, j)),
    ]
    args = [a, w_p, s_p, b_p]
    if has_res:
        # TODO(synk): residual is only consumed on the last K step; a Buffered(1)
        # spec / manual last-step copy would save its double-buffer VMEM.
        in_specs.append(pl.BlockSpec((tm, tn), lambda i, j, k: (i, j)))
        args.append(r)

    out = pl.pallas_call(
        functools.partial(_mm_kernel, relu=relu, has_res=has_res),
        out_shape=jax.ShapeDtypeStruct((Mp, Np), out_dtype),
        grid_spec=pltpu.PrefetchScalarGridSpec(
            num_scalar_prefetch=0,
            grid=(Mp // tm, Np // tn, k_steps),
            in_specs=in_specs,
            out_specs=pl.BlockSpec((tm, tn), lambda i, j, k: (i, j)),
            scratch_shapes=[pltpu.VMEM((tm, tn), jnp.float32)],
        ),
        compiler_params=pltpu.CompilerParams(
            dimension_semantics=("parallel", "parallel", "arbitrary"),
            vmem_limit_bytes=HW['vmem_limit']),
    )(*args)

    if Mp != M:
        out = out[:M]
    return out


# ----------------------------------------------------------------------------
# Tap-accumulation conv kernel (stride-1 3x3 / dilated 3x3): no im2col blow-up.
# x is the zero-padded activation flattened to (N, Hp*Wp + halo, Cin); each tap
# is a static row-offset window of that block.
# ----------------------------------------------------------------------------
def _tapconv_kernel(x_ref, w_ref, s_ref, b_ref, o_ref, acc_ref, *,
                    offsets, L, relu):
    @pl.when(pl.program_id(2) == 0)
    def _():
        acc_ref[...] = jnp.zeros_like(acc_ref)

    acc = acc_ref[...]
    for t, off in enumerate(offsets):               # static unroll over the taps
        acc = acc + jnp.dot(x_ref[0, pl.ds(off, L), :], w_ref[t],
                            preferred_element_type=jnp.float32)
    acc_ref[...] = acc

    @pl.when(pl.program_id(2) == pl.num_programs(2) - 1)
    def _():
        y = acc * s_ref[...] + b_ref[...]
        if relu:
            y = jnp.maximum(y, 0.0)
        o_ref[0] = y.astype(o_ref.dtype)


def tap_conv(x, f, *, relu):
    """Stride-1 spatial conv via tap accumulation. Returns None to request fallback."""
    Nb, H, W, Cin = x.shape
    kh, kw, pad, d = f['kh'], f['kw'], f['pad'], f['dil']
    cout_p = f['cout_p']
    Hp, Wp = H + 2 * pad, W + 2 * pad
    Hout, Wout = Hp - d * (kh - 1), Wp - d * (kw - 1)
    L = Hp * Wp
    halo = (kh - 1) * d * Wp + (kw - 1) * d
    if L > TAP_BLOWUP_CAP * Hout * Wout:
        return None                                 # padding blow-up too large

    T = kh * kw
    tk, tn = min(Cin, 512), min(cout_p, 512)

    def est(tk_, tn_):
        return (2 * (L + halo) * tk_ * 2 + 2 * T * tk_ * tn_ * 2
                + 2 * L * tn_ * 2 + L * tn_ * 4)

    budget = (HW['vmem_limit'] * 3) // 4
    while est(tk, tn) > budget and (tk > 128 or tn > 128):
        if tk >= tn and tk > 128:
            tk //= 2
        else:
            tn //= 2
    if est(tk, tn) > budget:
        return None
    if HW['num_tc'] >= 2 and Nb * (cout_p // tn) < 2 and tn >= 256:
        tn //= 2                                    # keep both TensorCores busy

    offsets = tuple(ti * d * Wp + tj * d for ti in range(kh) for tj in range(kw))
    xp = jnp.pad(x.astype(jnp.bfloat16),
                 ((0, 0), (pad, pad), (pad, pad), (0, 0))).reshape(Nb, L, Cin)
    xp = jnp.pad(xp, ((0, 0), (0, halo), (0, 0)))   # halo rows: genuine zeros

    try:
        out = pl.pallas_call(
            functools.partial(_tapconv_kernel, offsets=offsets, L=L, relu=relu),
            out_shape=jax.ShapeDtypeStruct((Nb, L, cout_p), jnp.bfloat16),
            grid_spec=pltpu.PrefetchScalarGridSpec(
                num_scalar_prefetch=0,
                grid=(Nb, cout_p // tn, Cin // tk),
                in_specs=[
                    pl.BlockSpec((1, L + halo, tk), lambda n, j, k: (n, 0, k)),
                    pl.BlockSpec((T, tk, tn), lambda n, j, k: (0, k, j)),
                    pl.BlockSpec((1, tn), lambda n, j, k: (0, j)),
                    pl.BlockSpec((1, tn), lambda n, j, k: (0, j)),
                ],
                out_specs=pl.BlockSpec((1, L, tn), lambda n, j, k: (n, 0, j)),
                scratch_shapes=[pltpu.VMEM((L, tn), jnp.float32)],
            ),
            compiler_params=pltpu.CompilerParams(
                dimension_semantics=("parallel", "parallel", "arbitrary"),
                vmem_limit_bytes=HW['vmem_limit']),
        )(xp, f['w9'], f['s_p'], f['b_p'])
    except Exception:
        return None                                 # safety net: im2col fallback

    return out.reshape(Nb, Hp, Wp, cout_p)[:, :Hout, :Wout, :]


# ----------------------------------------------------------------------------
# Conv2d dispatch: 1x1 -> resident-weight GEMM; stride-1 spatial -> tap kernel;
# else im2col GEMM fallback.  Epilogue always fuses BN / residual / ReLU.
# ----------------------------------------------------------------------------
def conv2d_fused(x, f, *, relu=False, residual=None):
    Nb, H, W, Cin = x.shape
    kh, kw = f['kh'], f['kw']
    stride, pad, dil = f['stride'], f['pad'], f['dil']
    Hout = (H + 2 * pad - dil * (kh - 1) - 1) // stride + 1
    Wout = (W + 2 * pad - dil * (kw - 1) - 1) // stride + 1
    cout_p = f['cout_p']

    if kh == 1 and kw == 1 and pad == 0 and dil == 1:
        a = x[:, ::stride, ::stride, :].reshape(Nb * Hout * Wout, Cin)
        r = (residual.reshape(Nb * Hout * Wout, cout_p)
             if residual is not None else None)
        y = matmul_fused(a, f['w2d'], f['s_p'], f['b_p'], relu=relu, residual=r)
        return y.reshape(Nb, Hout, Wout, cout_p)

    if stride == 1 and residual is None and Cin == f['cin_p'] and Cin % 128 == 0:
        y = tap_conv(x, f, relu=relu)
        if y is not None:
            return y

    # im2col fallback (strided convs, tiny-spatial ASPP, stem)
    xp = jnp.pad(x, ((0, 0), (pad, pad), (pad, pad), (0, 0)))
    cols = []
    for i in range(kh):
        for j in range(kw):
            hi, wj = i * dil, j * dil
            cols.append(xp[:, hi:hi + (Hout - 1) * stride + 1:stride,
                           wj:wj + (Wout - 1) * stride + 1:stride, :])
    a = jnp.concatenate(cols, axis=-1).reshape(Nb * Hout * Wout, kh * kw * Cin)
    r = (residual.reshape(Nb * Hout * Wout, cout_p)
         if residual is not None else None)
    y = matmul_fused(a, f['w2d'], f['s_p'], f['b_p'], relu=relu, residual=r)
    return y.reshape(Nb, Hout, Wout, cout_p)


def conv1x1_small(x, w, bias=None, scale=None, relu=False):
    """Tiny 1x1 conv (Cout or M too small for the MXU) in plain jnp, f32."""
    y = jnp.einsum('nhwc,oc->nhwo', x.astype(jnp.float32), w.astype(jnp.float32))
    if scale is not None:
        y = y * scale
    if bias is not None:
        y = y + bias
    if relu:
        y = jnp.maximum(y, 0.0)
    return y


def maxpool3x3s2(x):
    # TODO(synk): 3x3/s2 max-pool kept as lax.reduce_window (tiny window reduction).
    neg_inf = jnp.array(-jnp.inf, x.dtype)
    return jax.lax.reduce_window(x, neg_inf, jax.lax.max,
                                 (1, 3, 3, 1), (1, 2, 2, 1),
                                 ((0, 0), (1, 1), (1, 1), (0, 0)))


def bn_fuse(bn, eps=1e-5):
    scale = bn['gamma'] / jnp.sqrt(bn['var'] + eps)
    return scale, bn['beta'] - bn['mean'] * scale


# ----------------------------------------------------------------------------
# Deterministic parameter construction (shapes of DeepLabSegmeter / resnet50)
# ----------------------------------------------------------------------------
class KeyGen:
    def __init__(self, key):
        self.key = key

    def __call__(self):
        self.key, k = jax.random.split(self.key)
        return k


def conv_params(kg, cout, cin, kh, kw, bias=False):
    fan_in = cin * kh * kw
    w = jax.random.normal(kg(), (cout, cin, kh, kw), jnp.float32) / math.sqrt(fan_in)
    b = jax.random.normal(kg(), (cout,), jnp.float32) * 0.01 if bias else None
    return {'w': w, 'b': b}


def bn_params(c):
    return {'gamma': jnp.ones((c,), jnp.float32),
            'beta': jnp.zeros((c,), jnp.float32),
            'mean': jnp.zeros((c,), jnp.float32),
            'var': jnp.ones((c,), jnp.float32)}


def make_block(kg, inplanes, planes, stride, dilation, downsample):
    p = {
        'conv1': conv_params(kg, planes, inplanes, 1, 1),
        'bn1': bn_params(planes),
        'conv2': conv_params(kg, planes, planes, 3, 3),
        'bn2': bn_params(planes),
        'conv3': conv_params(kg, planes * 4, planes, 1, 1),
        'bn3': bn_params(planes * 4),
        'stride': stride, 'dilation': dilation,
    }
    if downsample:
        p['down_conv'] = conv_params(kg, planes * 4, inplanes, 1, 1)
        p['down_bn'] = bn_params(planes * 4)
    return p


def init_params(key, input_dim, feat_map_n_dims, heads_segmentation):
    kg = KeyGen(key)
    params = {'input_layer': conv_params(kg, 3, input_dim, 1, 1, bias=True)}

    backbone = {'conv1': conv_params(kg, 64, 3, 7, 7), 'bn1': bn_params(64)}
    inplanes, dilation = 64, 1
    # resnet50 with replace_stride_with_dilation=[False, True, True]
    layer_cfg = [('layer1', 64, 3, 1, False),
                 ('layer2', 128, 4, 2, False),
                 ('layer3', 256, 6, 2, True),
                 ('layer4', 512, 3, 2, True)]
    for name, planes, blocks, stride, dilate in layer_cfg:
        prev_dilation = dilation
        if dilate:
            dilation *= stride
            stride = 1
        downsample = (stride != 1) or (inplanes != planes * 4)
        layer = [make_block(kg, inplanes, planes, stride, prev_dilation, downsample)]
        inplanes = planes * 4
        for _ in range(1, blocks):
            layer.append(make_block(kg, inplanes, planes, 1, dilation, False))
        backbone[name] = layer
    params['backbone'] = backbone

    cls = {'aspp0': {'conv': conv_params(kg, 256, 2048, 1, 1), 'bn': bn_params(256)}}
    for i in range(3):  # dilations 12, 24, 36
        cls[f'aspp{i + 1}'] = {'conv': conv_params(kg, 256, 2048, 3, 3),
                               'bn': bn_params(256)}
    cls['aspp_pool'] = {'conv': conv_params(kg, 256, 2048, 1, 1), 'bn': bn_params(256)}
    cls['project'] = {'conv': conv_params(kg, 256, 5 * 256, 1, 1), 'bn': bn_params(256)}
    cls['head'] = {'conv': conv_params(kg, 256, 256, 3, 3), 'bn': bn_params(256)}
    cls['final'] = conv_params(kg, feat_map_n_dims, 256, 1, 1, bias=True)
    params['classifier'] = cls

    params['heads_segmentation'] = {
        name: conv_params(kg, out_c, feat_map_n_dims, 1, 1, bias=True)
        for name, out_c in heads_segmentation.items()}
    return params


# ----------------------------------------------------------------------------
# One-time preparation: bf16 weights in tap layout (T, Cin_p, Cout_p) and flat
# im2col layout (Kp, Cout_p); BN fused into (1, Cout_p) scale/bias.  Channel
# padding is baked in here so activations stay 128-channel-padded end to end.
# ----------------------------------------------------------------------------
def fuse_conv(conv, bn=None, *, stride=1, pad=0, dil=1, pad_cin=True):
    w = conv['w']                                   # (Cout, Cin, kh, kw)
    Cout, Cin, kh, kw = w.shape
    T = kh * kw
    cin_p = _round_up(Cin, 128) if pad_cin else Cin
    cout_p = _round_up(Cout, 128)
    if bn is not None:
        scale, bias = bn_fuse(bn)
    else:
        scale = jnp.ones((Cout,), jnp.float32)
        bias = conv['b'] if conv['b'] is not None else jnp.zeros((Cout,), jnp.float32)

    # (kh, kw, Cin, Cout) ordering matches both the tap enumeration and im2col columns
    w_t = jnp.transpose(w, (2, 3, 1, 0)).reshape(T, Cin, Cout).astype(jnp.bfloat16)
    w9 = jnp.zeros((T, cin_p, cout_p), jnp.bfloat16).at[:, :Cin, :Cout].set(w_t)
    K = T * cin_p
    K2p = _round_up(K, 128)
    w2d = w9.reshape(K, cout_p)
    if K2p != K:                                    # only the 7x7 stem (K=147)
        w2d = jnp.pad(w2d, ((0, K2p - K), (0, 0)))
    s_p = jnp.zeros((1, cout_p), jnp.float32).at[0, :Cout].set(scale)
    b_p = jnp.zeros((1, cout_p), jnp.float32).at[0, :Cout].set(bias)
    return {'w9': w9, 'w2d': w2d, 's_p': s_p, 'b_p': b_p,
            'kh': kh, 'kw': kw, 'stride': stride, 'pad': pad, 'dil': dil,
            'cin_p': cin_p, 'cout_p': cout_p, 'cout': Cout}


def prepare_params(params):
    P = {}
    ip = params['input_layer']
    P['input_w'], P['input_b'] = ip['w'][:, :, 0, 0], ip['b']      # tiny -> jnp

    b = params['backbone']
    P['stem'] = fuse_conv(b['conv1'], b['bn1'], stride=2, pad=3, pad_cin=False)
    for name in ('layer1', 'layer2', 'layer3', 'layer4'):
        blocks = []
        for blk in b[name]:
            e = {
                'conv1': fuse_conv(blk['conv1'], blk['bn1']),
                'conv2': fuse_conv(blk['conv2'], blk['bn2'], stride=blk['stride'],
                                   pad=blk['dilation'], dil=blk['dilation']),
                'conv3': fuse_conv(blk['conv3'], blk['bn3']),
            }
            if 'down_conv' in blk:
                e['down'] = fuse_conv(blk['down_conv'], blk['down_bn'],
                                      stride=blk['stride'])
            blocks.append(e)
        P[name] = blocks

    c = params['classifier']
    P['aspp0'] = fuse_conv(c['aspp0']['conv'], c['aspp0']['bn'])
    for i, d in enumerate((12, 24, 36)):
        P[f'aspp{i + 1}'] = fuse_conv(c[f'aspp{i + 1}']['conv'],
                                      c[f'aspp{i + 1}']['bn'], pad=d, dil=d)
    ap_scale, ap_bias = bn_fuse(c['aspp_pool']['bn'])
    P['aspp_pool'] = {'w': c['aspp_pool']['conv']['w'][:, :, 0, 0],   # M=batch -> jnp
                      'scale': ap_scale, 'bias': ap_bias}
    P['project'] = fuse_conv(c['project']['conv'], c['project']['bn'])
    P['head'] = fuse_conv(c['head']['conv'], c['head']['bn'], pad=1)
    P['final_w'] = c['final']['w'][:, :, 0, 0]                       # tiny -> jnp
    P['final_b'] = c['final']['b']
    P['heads'] = {name: (hp['w'][:, :, 0, 0], hp['b'])
                  for name, hp in params['heads_segmentation'].items()}
    return P


# ----------------------------------------------------------------------------
# Forward pass (DeepLabSegmeter.forward)
# ----------------------------------------------------------------------------
def bottleneck_forward(x, p):
    if 'down' in p:
        identity = conv2d_fused(x, p['down'], relu=False)
    else:
        identity = x
    out = conv2d_fused(x, p['conv1'], relu=True)
    out = conv2d_fused(out, p['conv2'], relu=True)
    # residual add + ReLU fused into the conv3 GEMM epilogue
    return conv2d_fused(out, p['conv3'], relu=True, residual=identity)


def deeplab_segmeter_forward(P, x_nchw, heads=None):
    x = jnp.transpose(x_nchw, (0, 2, 3, 1)).astype(jnp.float32)      # -> NHWC
    Nb, H, W, _ = x.shape

    # input_layer: 1x1 conv input_dim -> 3 (Cout=3: padding-dominated -> jnp)
    x = conv1x1_small(x, P['input_w'], bias=P['input_b']).astype(jnp.bfloat16)

    # resnet50 backbone (IntermediateLayerGetter -> layer4 output)
    x = conv2d_fused(x, P['stem'], relu=True)        # 128-channel-padded (64 real)
    x = maxpool3x3s2(x)
    for name in ('layer1', 'layer2', 'layer3', 'layer4'):
        for blk in P[name]:
            x = bottleneck_forward(x, blk)
    feat = x                                                          # (N,h,w,2048)
    h, wd = feat.shape[1], feat.shape[2]

    # DeepLabHead: ASPP
    branches = [conv2d_fused(feat, P['aspp0'], relu=True)]
    for i in range(3):
        branches.append(conv2d_fused(feat, P[f'aspp{i + 1}'], relu=True))
    pooled = jnp.mean(feat.astype(jnp.float32), axis=(1, 2), keepdims=True)
    ap = P['aspp_pool']
    pooled = conv1x1_small(pooled, ap['w'], bias=ap['bias'],
                           scale=ap['scale'], relu=True)
    branches.append(jnp.broadcast_to(pooled.astype(jnp.bfloat16),
                                     (Nb, h, wd, pooled.shape[-1])))
    y = jnp.concatenate(branches, axis=-1)
    y = conv2d_fused(y, P['project'], relu=True)
    # Dropout(0.5) -> identity (eval mode)
    y = conv2d_fused(y, P['head'], relu=True)
    y = conv1x1_small(y, P['final_w'], bias=P['final_b'])             # f32 output

    # F.interpolate(size=input, mode='bilinear', align_corners=False)
    y = jax.image.resize(y, (Nb, H, W, y.shape[-1]), method='bilinear')

    output = {'feature map': jnp.transpose(y, (0, 3, 1, 2))}          # back to NCHW
    head_names = list(P['heads'].keys()) if heads is None else heads
    for name in head_names:
        w_h, b_h = P['heads'][name]
        o = conv1x1_small(y, w_h, bias=b_h)
        output[name] = jnp.transpose(o, (0, 3, 1, 2))
    return output


# ----------------------------------------------------------------------------
if __name__ == "__main__":
    key = jax.random.PRNGKey(0)
    kp, kx = jax.random.split(key)

    batch, input_dim, spatial = 2, 4, 16
    feat_map_n_dims = 8
    heads_seg = {'mask': 2, 'parts': 3}

    params = init_params(kp, input_dim, feat_map_n_dims, heads_seg)
    prepared = prepare_params(params)
    x = jax.random.normal(kx, (batch, input_dim, spatial, spatial), jnp.float32)

    out = deeplab_segmeter_forward(prepared, x)
    out = jax.tree_util.tree_map(lambda a: a.block_until_ready(), out)

    assert out['feature map'].shape == (batch, feat_map_n_dims, spatial, spatial)
    assert out['mask'].shape == (batch, 2, spatial, spatial)
    assert out['parts'].shape == (batch, 3, spatial, spatial)
    assert all(bool(jnp.all(jnp.isfinite(v))) for v in out.values())
    print("KERNEL_OK")
</pallas_src>

<mosaic_0001>
module attributes {stable_mosaic.version = 11 : i64} {
  func.func @_mm_kernel(%arg0: i32, %arg1: i32, %arg2: i32, %arg3: memref<128x256xbf16, #tpu.memory_space<vmem>>, %arg4: memref<256x128xbf16, #tpu.memory_space<vmem>>, %arg5: memref<1x128xf32, #tpu.memory_space<vmem>>, %arg6: memref<1x128xf32, #tpu.memory_space<vmem>>, %arg7: memref<128x128xbf16, #tpu.memory_space<vmem>>, %arg8: memref<128x128xf32, #tpu.memory_space<vmem>>) attributes {dimension_semantics = [#tpu.dimension_semantics<parallel>, #tpu.dimension_semantics<parallel>, #tpu.dimension_semantics<arbitrary>], iteration_bounds = array<i64: 1, 1, 1>, scalar_prefetch = 0 : i64, scratch_operands = 1 : i64, tpu.core_type = #tpu.core_type<tc>, window_params = [{transform_indices = @transform_0, window_bounds = array<i64: 128, 256>}, {transform_indices = @transform_1, window_bounds = array<i64: 256, 128>}, {transform_indices = @transform_2, window_bounds = array<i64: 1, 128>}, {transform_indices = @transform_3, window_bounds = array<i64: 1, 128>}, {transform_indices = @transform_4, window_bounds = array<i64: 128, 128>}]} {
    %c0_i32 = arith.constant 0 : i32
    %0 = arith.cmpi eq, %arg2, %c0_i32 : i32
    %1 = arith.extui %0 : i1 to i32
    %c0_i32_0 = arith.constant 0 : i32
    %2 = arith.cmpi ne, %1, %c0_i32_0 : i32
    scf.if %2 {
      %cst_10 = arith.constant 0.000000e+00 : f32
      %12 = vector.broadcast %cst_10 : f32 to vector<128x128xf32>
      %c0_11 = arith.constant 0 : index
      %c0_12 = arith.constant 0 : index
      %13 = vector.load %arg8[%c0_11, %c0_12] : memref<128x128xf32, #tpu.memory_space<vmem>>, vector<128x128xf32>
      tpu.vector_store %arg8[%c0_11, %c0_12], %12 {strides = array<i32>} : memref<128x128xf32, #tpu.memory_space<vmem>>, vector<128x128xf32>,
    } else {
    }
    %c0 = arith.constant 0 : index
    %c0_1 = arith.constant 0 : index
    %3 = vector.load %arg8[%c0, %c0_1] : memref<128x128xf32, #tpu.memory_space<vmem>>, vector<128x128xf32>
    %c0_2 = arith.constant 0 : index
    %c0_3 = arith.constant 0 : index
    %4 = vector.load %arg3[%c0_2, %c0_3] : memref<128x256xbf16, #tpu.memory_space<vmem>>, vector<128x256xbf16>
    %c0_4 = arith.constant 0 : index
    %c0_5 = arith.constant 0 : index
    %5 = vector.load %arg4[%c0_4, %c0_5] : memref<256x128xbf16, #tpu.memory_space<vmem>>, vector<256x128xbf16>
    %cst = arith.constant dense<0.000000e+00> : vector<128x128xf32>
    %6 = tpu.matmul %4, %5, %cst {dimension_numbers = #tpu.dot_dimension_numbers<[1], [0], [0], [1], [0, 0, 1, 1], [], []>} : vector<128x256xbf16>, vector<256x128xbf16>, vector<128x128xf32> -> vector<128x128xf32>
    %7 = arith.addf %3, %6 : vector<128x128xf32>
    %c0_6 = arith.constant 0 : index
    %c0_7 = arith.constant 0 : index
    %8 = vector.load %arg8[%c0_6, %c0_7] : memref<128x128xf32, #tpu.memory_space<vmem>>, vector<128x128xf32>
    tpu.vector_store %arg8[%c0_6, %c0_7], %7 {strides = array<i32>} : memref<128x128xf32, #tpu.memory_space<vmem>>, vector<128x128xf32>,
    %c0_i32_8 = arith.constant 0 : i32
    %9 = arith.cmpi eq, %arg2, %c0_i32_8 : i32
    %10 = arith.extui %9 : i1 to i32
    %c0_i32_9 = arith.constant 0 : i32
    %11 = arith.cmpi ne, %10, %c0_i32_9 : i32
    scf.if %11 {
      %c0_10 = arith.constant 0 : index
      %c0_11 = arith.constant 0 : index
      %12 = vector.load %arg8[%c0_10, %c0_11] : memref<128x128xf32, #tpu.memory_space<vmem>>, vector<128x128xf32>
      %c0_12 = arith.constant 0 : index
      %c0_13 = arith.constant 0 : index
      %13 = vector.load %arg5[%c0_12, %c0_13] : memref<1x128xf32, #tpu.memory_space<vmem>>, vector<1x128xf32>
      %14 = vector.broadcast %13 : vector<1x128xf32> to vector<128x128xf32>
      %15 = arith.mulf %12, %14 : vector<128x128xf32>
      %c0_14 = arith.constant 0 : index
      %c0_15 = arith.constant 0 : index
      %16 = vector.load %arg6[%c0_14, %c0_15] : memref<1x128xf32, #tpu.memory_space<vmem>>, vector<1x128xf32>
      %17 = vector.broadcast %16 : vector<1x128xf32> to vector<128x128xf32>
      %18 = arith.addf %15, %17 : vector<128x128xf32>
      %cst_16 = arith.constant 0.000000e+00 : f32
      %19 = vector.broadcast %cst_16 : f32 to vector<128x128xf32>
      %20 = arith.maximumf %18, %19 : vector<128x128xf32>
      %21 = arith.truncf %20 : vector<128x128xf32> to vector<128x128xbf16>
      %c0_17 = arith.constant 0 : index
      %c0_18 = arith.constant 0 : index
      %22 = vector.load %arg7[%c0_17, %c0_18] : memref<128x128xbf16, #tpu.memory_space<vmem>>, vector<128x128xbf16>
      tpu.vector_store %arg7[%c0_17, %c0_18], %21 {strides = array<i32>} : memref<128x128xbf16, #tpu.memory_space<vmem>>, vector<128x128xbf16>,
    } else {
    }
    return
  }
  func.func @transform_0(%arg0: i32, %arg1: i32, %arg2: i32) -> (i32, i32) {
    %c0_i32 = arith.constant 0 : i32
    return %arg0, %arg2 : i32, i32
  }
  func.func @transform_1(%arg0: i32, %arg1: i32, %arg2: i32) -> (i32, i32) {
    %c0_i32 = arith.constant 0 : i32
    return %arg2, %arg1 : i32, i32
  }
  func.func @transform_2(%arg0: i32, %arg1: i32, %arg2: i32) -> (i32, i32) {
    %c0_i32 = arith.constant 0 : i32
    %c0_i32_0 = arith.constant 0 : i32
    return %c0_i32, %arg1 : i32, i32
  }
  func.func @transform_3(%arg0: i32, %arg1: i32, %arg2: i32) -> (i32, i32) {
    %c0_i32 = arith.constant 0 : i32
    %c0_i32_0 = arith.constant 0 : i32
    return %c0_i32, %arg1 : i32, i32
  }
  func.func @transform_4(%arg0: i32, %arg1: i32, %arg2: i32) -> (i32, i32) {
    %c0_i32 = arith.constant 0 : i32
    return %arg0, %arg1 : i32, i32
  }
}

</mosaic_0001>

<llo_original>
// kernel: tpu_custom_call.1
$region0: #{tpu_custom_call.1}
  #allocation0 [shape = 'u32[]', space=smem, size = 0x4, offset = 0x4, fixed_abs, tag = 'smem constant byte address 0x4 - core index']
  #allocation1 [shape = 'u32[144,128]{1,0:T(1,128)}', space=vmem, size = 0x12000, scoped, tag = 'internal scratch']
  #allocation2 [shape = 'f32[128,128]{1,0:T(8,128)}', space=vmem, size = 0x10000, scoped, tag = 'scratch operand']
  %s0 = inlined_call_operand.hbm [shape: bf16[128,256], index: 0, kind: input, shape index: {}]
  %s1 = inlined_call_operand.hbm [shape: bf16[256,128], index: 1, kind: input, shape index: {}]
  %s2 = inlined_call_operand.vmem [shape: f32[1,128], index: 2, kind: input, shape index: {}]
  %s3 = inlined_call_operand.vmem [shape: f32[1,128], index: 3, kind: input, shape index: {}]
  %s4 = inlined_call_operand.hbm [shape: bf16[128,128], index: 4, kind: output, shape index: {}]
  %s5 = sld [smem:[#allocation0]]
  $region42: #{tpu_custom_call.1} parent=0
    _
  %s7 = ssub.s32 1, %s5
  %s8 = scalar_select 0, %s7, %s5
  $region1: #{tpu_custom_call.1} parent=0
    #allocation3 [shape = 'u8[65536]{0}', space=vmem, size = 0x10000, scoped, tag = 'input window, operand 0, single buffered']
    #allocation4 [shape = 's32[1]{0}', space=sflag, size = 0x4, scoped, tag = 'scoped memory for tpu_custom_call.1']
    #allocation5 [shape = 's32[1]{0}', space=sflag, size = 0x4, scoped, tag = 'scoped memory for tpu_custom_call.1']
    #allocation6 [shape = 'u8[65536]{0}', space=vmem, size = 0x10000, scoped, tag = 'input window, operand 1, single buffered']
    #allocation7 [shape = 's32[1]{0}', space=sflag, size = 0x4, scoped, tag = 'scoped memory for tpu_custom_call.1']
    #allocation8 [shape = 'u8[32768]{0}', space=vmem, size = 0x8000, scoped, tag = 'output window, operand 0, single buffered']
    %9 = vsyncpa [#allocation4], 0
    %10 = vsyncpa [#allocation7], 0
    %11 = vsyncpa [#allocation5], 0
    // Predicated region
    $region2: #{tpu_custom_call.1} parent=1 // pred_check
      _
    $region3: #{tpu_custom_call.1} parent=1 // pred_check_branch
      %13 = sbr.rel (0) target = $region5
    $region4: #{tpu_custom_call.1} parent=1 // pred_region
      %s15 = ssub.s32 2048, 2048
      %16 = vsyncadd [#allocation4], %s15
      %s17 = sshll.u32 [#allocation3], 4
      %s18 = int_to_ptr.vmem [resolvable:$true] %s17
      %23 = dma.hbm_to_vmem [thread:$0]  %s0, 2048, %s18, [#allocation4], 128, 128, 8
    $region5: #{tpu_custom_call.1} parent=1 // pred_fallthru
      _
    // Predicated region
    $region6: #{tpu_custom_call.1} parent=1 // pred_check
      _
    $region7: #{tpu_custom_call.1} parent=1 // pred_check_branch
      %25 = sbr.rel (0) target = $region9
    $region8: #{tpu_custom_call.1} parent=1 // pred_region
      %s27 = ssub.s32 2048, 2048
      %28 = vsyncadd [#allocation7], %s27
      %s29 = sshll.u32 [#allocation6], 4
      %s30 = int_to_ptr.vmem [resolvable:$true] %s29
      %35 = dma.hbm_to_vmem [thread:$0]  %s1, 2048, %s30, [#allocation7], 64, 64, 4
    $region9: #{tpu_custom_call.1} parent=1 // pred_fallthru
      _
    // Predicated region
    $region10: #{tpu_custom_call.1} parent=1 // pred_check
      _
    $region11: #{tpu_custom_call.1} parent=1 // pred_check_branch
      %37 = sbr.rel (0) target = $region13
    $region12: #{tpu_custom_call.1} parent=1 // pred_region
      _
    $region13: #{tpu_custom_call.1} parent=1 // pred_fallthru
      _
    // Predicated region
    $region14: #{tpu_custom_call.1} parent=1 // pred_check
      _
    $region15: #{tpu_custom_call.1} parent=1 // pred_check_branch
      %39 = sbr.rel (0) target = $region17
    $region16: #{tpu_custom_call.1} parent=1 // pred_region
      _
    $region17: #{tpu_custom_call.1} parent=1 // pred_fallthru
      _
    // Predicated region
    $region18: #{tpu_custom_call.1} parent=1 // pred_check
      _
    $region19: #{tpu_custom_call.1} parent=1 // pred_check_branch
      %41 = sbr.rel (0) target = $region21
    $region20: #{tpu_custom_call.1} parent=1 // pred_region
      %42 = dma.done [#allocation4], 2048
    $region21: #{tpu_custom_call.1} parent=1 // pred_fallthru
      _
    // Predicated region
    $region22: #{tpu_custom_call.1} parent=1 // pred_check
      _
    $region23: #{tpu_custom_call.1} parent=1 // pred_check_branch
      %44 = sbr.rel (0) target = $region25
    $region24: #{tpu_custom_call.1} parent=1 // pred_region
      %45 = dma.done [#allocation7], 2048
    $region25: #{tpu_custom_call.1} parent=1 // pred_fallthru
      _
    %p47 = scmp.eq.s32.totalorder 0, 0
    // Predicated region
    $region26: #{tpu_custom_call.1} parent=1 // pred_check
      %p48 = pneg %p47
    $region27: #{tpu_custom_call.1} parent=1 // pred_check_branch
      %50 = sbr.rel (%p48) target = $region29
    $region28: #{tpu_custom_call.1} parent=1 // pred_region
      %51 = vst [vmem:[#allocation2] sm:$0xff] 0.0
      %52 = vst [vmem:[#allocation2 + $0x8] sm:$0xff] 0.0
      %53 = vst [vmem:[#allocation2 + $0x10] sm:$0xff] 0.0
      %54 = vst [vmem:[#allocation2 + $0x18] sm:$0xff] 0.0
      %55 = vst [vmem:[#allocation2 + $0x20] sm:$0xff] 0.0
      %56 = vst [vmem:[#allocation2 + $0x28] sm:$0xff] 0.0
      %57 = vst [vmem:[#allocation2 + $0x30] sm:$0xff] 0.0
      %58 = vst [vmem:[#allocation2 + $0x38] sm:$0xff] 0.0
      %59 = vst [vmem:[#allocation2 + $0x40] sm:$0xff] 0.0
      %60 = vst [vmem:[#allocation2 + $0x48] sm:$0xff] 0.0
      %61 = vst [vmem:[#allocation2 + $0x50] sm:$0xff] 0.0
      %62 = vst [vmem:[#allocation2 + $0x58] sm:$0xff] 0.0
      %63 = vst [vmem:[#allocation2 + $0x60] sm:$0xff] 0.0
      %64 = vst [vmem:[#allocation2 + $0x68] sm:$0xff] 0.0
      %65 = vst [vmem:[#allocation2 + $0x70] sm:$0xff] 0.0
      %66 = vst [vmem:[#allocation2 + $0x78] sm:$0xff] 0.0
    $region29: #{tpu_custom_call.1} parent=1 // pred_fallthru
      _
    %v67 = vld [vmem:[#allocation2] sm:$0xff]
    %v68 = vld [vmem:[#allocation2 + $0x8] sm:$0xff]
    %v69 = vld [vmem:[#allocation2 + $0x10] sm:$0xff]
    %v70 = vld [vmem:[#allocation2 + $0x18] sm:$0xff]
    %v71 = vld [vmem:[#allocation2 + $0x20] sm:$0xff]
    %v72 = vld [vmem:[#allocation2 + $0x28] sm:$0xff]
    %v73 = vld [vmem:[#allocation2 + $0x30] sm:$0xff]
    %v74 = vld [vmem:[#allocation2 + $0x38] sm:$0xff]
    %v75 = vld [vmem:[#allocation2 + $0x40] sm:$0xff]
    %v76 = vld [vmem:[#allocation2 + $0x48] sm:$0xff]
    %v77 = vld [vmem:[#allocation2 + $0x50] sm:$0xff]
    %v78 = vld [vmem:[#allocation2 + $0x58] sm:$0xff]
    %v79 = vld [vmem:[#allocation2 + $0x60] sm:$0xff]
    %v80 = vld [vmem:[#allocation2 + $0x68] sm:$0xff]
    %v81 = vld [vmem:[#allocation2 + $0x70] sm:$0xff]
    %v82 = vld [vmem:[#allocation2 + $0x78] sm:$0xff]
    %v83 = vld [vmem:[#allocation3] sm:$0xff]
    %v84 = vld [vmem:[#allocation3 + $0x8] sm:$0xff]
    %v85 = vld [vmem:[#allocation3 + $0x10] sm:$0xff]
    %v86 = vld [vmem:[#allocation3 + $0x18] sm:$0xff]
    %v87 = vld [vmem:[#allocation3 + $0x20] sm:$0xff]
    %v88 = vld [vmem:[#allocation3 + $0x28] sm:$0xff]
    %v89 = vld [vmem:[#allocation3 + $0x30] sm:$0xff]
    %v90 = vld [vmem:[#allocation3 + $0x38] sm:$0xff]
    %v91 = vld [vmem:[#allocation3 + $0x40] sm:$0xff]
    %v92 = vld [vmem:[#allocation3 + $0x48] sm:$0xff]
    %v93 = vld [vmem:[#allocation3 + $0x50] sm:$0xff]
    %v94 = vld [vmem:[#allocation3 + $0x58] sm:$0xff]
    %v95 = vld [vmem:[#allocation3 + $0x60] sm:$0xff]
    %v96 = vld [vmem:[#allocation3 + $0x68] sm:$0xff]
    %v97 = vld [vmem:[#allocation3 + $0x70] sm:$0xff]
    %v98 = vld [vmem:[#allocation3 + $0x78] sm:$0xff]
    %v99 = vld [vmem:[#allocation6] sm:$0xf]
    %v100 = vld [vmem:[#allocation6 + $0x4] sm:$0xf]
    %v101 = vld [vmem:[#allocation6 + $0x8] sm:$0xf]
    %v102 = vld [vmem:[#allocation6 + $0xc] sm:$0xf]
    %v103 = vld [vmem:[#allocation6 + $0x10] sm:$0xf]
    %v104 = vld [vmem:[#allocation6 + $0x14] sm:$0xf]
    %v105 = vld [vmem:[#allocation6 + $0x18] sm:$0xf]
    %v106 = vld [vmem:[#allocation6 + $0x1c] sm:$0xf]
    %v107 = vld [vmem:[#allocation6 + $0x20] sm:$0xf]
    %v108 = vld [vmem:[#allocation6 + $0x24] sm:$0xf]
    %v109 = vld [vmem:[#allocation6 + $0x28] sm:$0xf]
    %v110 = vld [vmem:[#allocation6 + $0x2c] sm:$0xf]
    %v111 = vld [vmem:[#allocation6 + $0x30] sm:$0xf]
    %v112 = vld [vmem:[#allocation6 + $0x34] sm:$0xf]
    %v113 = vld [vmem:[#allocation6 + $0x38] sm:$0xf]
    %v114 = vld [vmem:[#allocation6 + $0x3c] sm:$0xf]
    %v115 = vld [vmem:[#allocation6 + $0x40] sm:$0xf]
    %v116 = vld [vmem:[#allocation6 + $0x44] sm:$0xf]
    %v117 = vld [vmem:[#allocation6 + $0x48] sm:$0xf]
    %v118 = vld [vmem:[#allocation6 + $0x4c] sm:$0xf]
    %v119 = vld [vmem:[#allocation6 + $0x50] sm:$0xf]
    %v120 = vld [vmem:[#allocation6 + $0x54] sm:$0xf]
    %v121 = vld [vmem:[#allocation6 + $0x58] sm:$0xf]
    %v122 = vld [vmem:[#allocation6 + $0x5c] sm:$0xf]
    %v123 = vld [vmem:[#allocation6 + $0x60] sm:$0xf]
    %v124 = vld [vmem:[#allocation6 + $0x64] sm:$0xf]
    %v125 = vld [vmem:[#allocation6 + $0x68] sm:$0xf]
    %v126 = vld [vmem:[#allocation6 + $0x6c] sm:$0xf]
    %v127 = vld [vmem:[#allocation6 + $0x70] sm:$0xf]
    %v128 = vld [vmem:[#allocation6 + $0x74] sm:$0xf]
    %v129 = vld [vmem:[#allocation6 + $0x78] sm:$0xf]
    %v130 = vld [vmem:[#allocation6 + $0x7c] sm:$0xf]
    %v147 = vunpack.c.l.b16 %v83
    %v148 = vunpack.c.h.b16 %v83
    %v149 = vunpack.c.l.b16 %v84
    %v150 = vunpack.c.h.b16 %v84
    %v151 = vunpack.c.l.b16 %v85
    %v152 = vunpack.c.h.b16 %v85
    %v153 = vunpack.c.l.b16 %v86
    %v154 = vunpack.c.h.b16 %v86
    %v155 = vunpack.c.l.b16 %v87
    %v156 = vunpack.c.h.b16 %v87
    %v157 = vunpack.c.l.b16 %v88
    %v158 = vunpack.c.h.b16 %v88
    %v159 = vunpack.c.l.b16 %v89
    %v160 = vunpack.c.h.b16 %v89
    %v161 = vunpack.c.l.b16 %v90
    %v162 = vunpack.c.h.b16 %v90
    %v163 = vunpack.c.l.b16 %v91
    %v164 = vunpack.c.h.b16 %v91
    %v165 = vunpack.c.l.b16 %v92
    %v166 = vunpack.c.h.b16 %v92
    %v167 = vunpack.c.l.b16 %v93
    %v168 = vunpack.c.h.b16 %v93
    %v169 = vunpack.c.l.b16 %v94
    %v170 = vunpack.c.h.b16 %v94
    %v171 = vunpack.c.l.b16 %v95
    %v172 = vunpack.c.h.b16 %v95
    %v173 = vunpack.c.l.b16 %v96
    %v174 = vunpack.c.h.b16 %v96
    %v175 = vunpack.c.l.b16 %v97
    %v176 = vunpack.c.h.b16 %v97
    %v177 = vunpack.c.l.b16 %v98
    %v178 = vunpack.c.h.b16 %v98
    %v179 = vpack.c.b16 %v149, %v147
    %v180 = vpack.c.b16 %v150, %v148
    %v181 = vpack.c.b16 %v153, %v151
    %v182 = vpack.c.b16 %v154, %v152
    %v183 = vpack.c.b16 %v157, %v155
    %v184 = vpack.c.b16 %v158, %v156
    %v185 = vpack.c.b16 %v161, %v159
    %v186 = vpack.c.b16 %v162, %v160
    %v187 = vpack.c.b16 %v165, %v163
    %v188 = vpack.c.b16 %v166, %v164
    %v189 = vpack.c.b16 %v169, %v167
    %v190 = vpack.c.b16 %v170, %v168
    %v191 = vpack.c.b16 %v173, %v171
    %v192 = vpack.c.b16 %v174, %v172
    %v193 = vpack.c.b16 %v177, %v175
    %v194 = vpack.c.b16 %v178, %v176
    %v243 = vunpack.c.l.b16 %v99
    %v244 = vunpack.c.l.b16 %v100
    %v245 = vunpack.c.l.b16 %v101
    %v246 = vunpack.c.l.b16 %v102
    %v247 = vunpack.c.l.b16 %v103
    %v248 = vunpack.c.l.b16 %v104
    %v249 = vunpack.c.l.b16 %v105
    %v250 = vunpack.c.l.b16 %v106
    %v251 = vunpack.c.l.b16 %v107
    %v252 = vunpack.c.l.b16 %v108
    %v253 = vunpack.c.l.b16 %v109
    %v254 = vunpack.c.l.b16 %v110
    %v255 = vunpack.c.l.b16 %v111
    %v256 = vunpack.c.l.b16 %v112
    %v257 = vunpack.c.l.b16 %v113
    %v258 = vunpack.c.l.b16 %v114
    %v259 = vunpack.c.l.b16 %v115
    %v260 = vunpack.c.l.b16 %v116
    %v261 = vunpack.c.l.b16 %v117
    %v262 = vunpack.c.l.b16 %v118
    %v263 = vunpack.c.l.b16 %v119
    %v264 = vunpack.c.l.b16 %v120
    %v265 = vunpack.c.l.b16 %v121
    %v266 = vunpack.c.l.b16 %v122
    %v267 = vunpack.c.l.b16 %v123
    %v268 = vunpack.c.l.b16 %v124
    %v269 = vunpack.c.l.b16 %v125
    %v270 = vunpack.c.l.b16 %v126
    %v271 = vunpack.c.l.b16 %v127
    %v272 = vunpack.c.l.b16 %v128
    %v273 = vunpack.c.l.b16 %v129
    %v274 = vunpack.c.l.b16 %v130
    %v275 = vpack.c.b16 %v244, %v243
    %v276 = vpack.c.b16 %v246, %v245
    %v277 = vpack.c.b16 %v248, %v247
    %v278 = vpack.c.b16 %v250, %v249
    %v279 = vpack.c.b16 %v252, %v251
    %v280 = vpack.c.b16 %v254, %v253
    %v281 = vpack.c.b16 %v256, %v255
    %v282 = vpack.c.b16 %v258, %v257
    %v283 = vpack.c.b16 %v260, %v259
    %v284 = vpack.c.b16 %v262, %v261
    %v285 = vpack.c.b16 %v264, %v263
    %v286 = vpack.c.b16 %v266, %v265
    %v287 = vpack.c.b16 %v268, %v267
    %v288 = vpack.c.b16 %v270, %v269
    %v289 = vpack.c.b16 %v272, %v271
    %v290 = vpack.c.b16 %v274, %v273
    %307 = vmatprep.subr.bf16.mxu0 0
    %308 = vmatpush1.bf16.msra.mxu0 %v275
    %309 = vmatprep.subr.bf16.mxu0 0
    %310 = vmatpush1.bf16.msra.mxu0 %v276
    %311 = vmatprep.subr.bf16.mxu0 0
    %312 = vmatpush1.bf16.msra.mxu0 %v277
    %313 = vmatprep.subr.bf16.mxu0 0
    %314 = vmatpush1.bf16.msra.mxu0 %v278
    %315 = vmatprep.subr.bf16.mxu0 0
    %316 = vmatpush1.bf16.msra.mxu0 %v279
    %317 = vmatprep.subr.bf16.mxu0 0
    %318 = vmatpush1.bf16.msra.mxu0 %v280
    %319 = vmatprep.subr.bf16.mxu0 0
    %320 = vmatpush1.bf16.msra.mxu0 %v281
    %321 = vmatprep.subr.bf16.mxu0 0
    %322 = vmatpush1.bf16.msra.mxu0 %v282
    %323 = vmatprep.subr.bf16.mxu0 0
    %324 = vmatpush1.bf16.msra.mxu0 %v283
    %325 = vmatprep.subr.bf16.mxu0 0
    %326 = vmatpush1.bf16.msra.mxu0 %v284
    %327 = vmatprep.subr.bf16.mxu0 0
    %328 = vmatpush1.bf16.msra.mxu0 %v285
    %329 = vmatprep.subr.bf16.mxu0 0
    %330 = vmatpush1.bf16.msra.mxu0 %v286
    %331 = vmatprep.subr.bf16.mxu0 0
    %332 = vmatpush1.bf16.msra.mxu0 %v287
    %333 = vmatprep.subr.bf16.mxu0 0
    %334 = vmatpush1.bf16.msra.mxu0 %v288
    %335 = vmatprep.subr.bf16.mxu0 0
    %336 = vmatpush1.bf16.msra.mxu0 %v289
    %337 = vmatprep.subr.bf16.mxu0 0
    %338 = vmatpush1.bf16.msra.mxu0 %v290
    %339 = vmatprep.mubr.bf16.mxu0 %v180
    %340 = vmatmul.mubr.bf16.gmra.mrb[0].mxu0 %v179
    %v341 = vpop.f32.mrb[0].mxu0
    %v342 = vadd.f32 0.0, %v341
    %v343 = vpop.f32.mrb[0].mxu0
    %v344 = vpop.f32.mrb[0].mxu0
    %v345 = vadd.f32 0.0, %v344
    %v346 = vpop.f32.mrb[0].mxu0
    %347 = vmatprep.mubr.bf16.mxu0 %v182
    %348 = vmatmul.mubr.bf16.gmra.mrb[0].mxu0 %v181
    %v349 = vpop.f32.mrb[0].mxu0
    %v350 = vadd.f32 0.0, %v349
    %v351 = vpop.f32.mrb[0].mxu0
    %v352 = vpop.f32.mrb[0].mxu0
    %v353 = vadd.f32 0.0, %v352
    %v354 = vpop.f32.mrb[0].mxu0
    %355 = vmatprep.mubr.bf16.mxu0 %v184
    %356 = vmatmul.mubr.bf16.gmra.mrb[0].mxu0 %v183
    %v357 = vpop.f32.mrb[0].mxu0
    %v358 = vadd.f32 0.0, %v357
    %v359 = vpop.f32.mrb[0].mxu0
    %v360 = vpop.f32.mrb[0].mxu0
    %v361 = vadd.f32 0.0, %v360
    %v362 = vpop.f32.mrb[0].mxu0
    %363 = vmatprep.mubr.bf16.mxu0 %v186
    %364 = vmatmul.mubr.bf16.gmra.mrb[0].mxu0 %v185
    %v365 = vpop.f32.mrb[0].mxu0
    %v366 = vadd.f32 0.0, %v365
    %v367 = vpop.f32.mrb[0].mxu0
    %v368 = vpop.f32.mrb[0].mxu0
    %v369 = vadd.f32 0.0, %v368
    %v370 = vpop.f32.mrb[0].mxu0
    %371 = vmatprep.mubr.bf16.mxu0 %v188
    %372 = vmatmul.mubr.bf16.gmra.mrb[0].mxu0 %v187
    %v373 = vpop.f32.mrb[0].mxu0
    %v374 = vadd.f32 0.0, %v373
    %v375 = vpop.f32.mrb[0].mxu0
    %v376 = vpop.f32.mrb[0].mxu0
    %v377 = vadd.f32 0.0, %v376
    %v378 = vpop.f32.mrb[0].mxu0
    %379 = vmatprep.mubr.bf16.mxu0 %v190
    %380 = vmatmul.mubr.bf16.gmra.mrb[0].mxu0 %v189
    %v381 = vpop.f32.mrb[0].mxu0
    %v382 = vadd.f32 0.0, %v381
    %v383 = vpop.f32.mrb[0].mxu0
    %v384 = vpop.f32.mrb[0].mxu0
    %v385 = vadd.f32 0.0, %v384
    %v386 = vpop.f32.mrb[0].mxu0
    %387 = vmatprep.mubr.bf16.mxu0 %v192
    %388 = vmatmul.mubr.bf16.gmra.mrb[0].mxu0 %v191
    %v389 = vpop.f32.mrb[0].mxu0
    %v390 = vadd.f32 0.0, %v389
    %v391 = vpop.f32.mrb[0].mxu0
    %v392 = vpop.f32.mrb[0].mxu0
    %v393 = vadd.f32 0.0, %v392
    %v394 = vpop.f32.mrb[0].mxu0
    %395 = vmatprep.mubr.bf16.mxu0 %v194
    %396 = vmatmul.mubr.bf16.gmra.mrb[0].mxu0 %v193
    %v397 = vpop.f32.mrb[0].mxu0
    %v398 = vadd.f32 0.0, %v397
    %v399 = vpop.f32.mrb[0].mxu0
    %v400 = vpop.f32.mrb[0].mxu0
    %v401 = vadd.f32 0.0, %v400
    %v402 = vpop.f32.mrb[0].mxu0
    %403 = vdwg.mxu0
    %v404 = vadd.f32 %v67, %v342
    %v405 = vadd.f32 %v68, %v345
    %v406 = vadd.f32 %v69, %v350
    %v407 = vadd.f32 %v70, %v353
    %v408 = vadd.f32 %v71, %v358
    %v409 = vadd.f32 %v72, %v361
    %v410 = vadd.f32 %v73, %v366
    %v411 = vadd.f32 %v74, %v369
    %v412 = vadd.f32 %v75, %v374
    %v413 = vadd.f32 %v76, %v377
    %v414 = vadd.f32 %v77, %v382
    %v415 = vadd.f32 %v78, %v385
    %v416 = vadd.f32 %v79, %v390
    %v417 = vadd.f32 %v80, %v393
    %v418 = vadd.f32 %v81, %v398
    %v419 = vadd.f32 %v82, %v401
    %420 = vst [vmem:[#allocation2] sm:$0xff] %v404
    %421 = vst [vmem:[#allocation2 + $0x8] sm:$0xff] %v405
    %422 = vst [vmem:[#allocation2 + $0x10] sm:$0xff] %v406
    %423 = vst [vmem:[#allocation2 + $0x18] sm:$0xff] %v407
    %424 = vst [vmem:[#allocation2 + $0x20] sm:$0xff] %v408
    %425 = vst [vmem:[#allocation2 + $0x28] sm:$0xff] %v409
    %426 = vst [vmem:[#allocation2 + $0x30] sm:$0xff] %v410
    %427 = vst [vmem:[#allocation2 + $0x38] sm:$0xff] %v411
    %428 = vst [vmem:[#allocation2 + $0x40] sm:$0xff] %v412
    %429 = vst [vmem:[#allocation2 + $0x48] sm:$0xff] %v413
    %430 = vst [vmem:[#allocation2 + $0x50] sm:$0xff] %v414
    %431 = vst [vmem:[#allocation2 + $0x58] sm:$0xff] %v415
    %432 = vst [vmem:[#allocation2 + $0x60] sm:$0xff] %v416
    %433 = vst [vmem:[#allocation2 + $0x68] sm:$0xff] %v417
    %434 = vst [vmem:[#allocation2 + $0x70] sm:$0xff] %v418
    %435 = vst [vmem:[#allocation2 + $0x78] sm:$0xff] %v419
    // Predicated region
    $region30: #{tpu_custom_call.1} parent=1 // pred_check
      %p436 = pneg %p47
    $region31: #{tpu_custom_call.1} parent=1 // pred_check_branch
      %438 = sbr.rel (%p436) target = $region33
    $region32: #{tpu_custom_call.1} parent=1 // pred_region
      %v439 = vld [vmem:[#allocation2] sm:$0xff]
      %v440 = vld [vmem:[#allocation2 + $0x8] sm:$0xff]
      %v441 = vld [vmem:[#allocation2 + $0x10] sm:$0xff]
      %v442 = vld [vmem:[#allocation2 + $0x18] sm:$0xff]
      %v443 = vld [vmem:[#allocation2 + $0x20] sm:$0xff]
      %v444 = vld [vmem:[#allocation2 + $0x28] sm:$0xff]
      %v445 = vld [vmem:[#allocation2 + $0x30] sm:$0xff]
      %v446 = vld [vmem:[#allocation2 + $0x38] sm:$0xff]
      %v447 = vld [vmem:[#allocation2 + $0x40] sm:$0xff]
      %v448 = vld [vmem:[#allocation2 + $0x48] sm:$0xff]
      %v449 = vld [vmem:[#allocation2 + $0x50] sm:$0xff]
      %v450 = vld [vmem:[#allocation2 + $0x58] sm:$0xff]
      %v451 = vld [vmem:[#allocation2 + $0x60] sm:$0xff]
      %v452 = vld [vmem:[#allocation2 + $0x68] sm:$0xff]
      %v453 = vld [vmem:[#allocation2 + $0x70] sm:$0xff]
      %v454 = vld [vmem:[#allocation2 + $0x78] sm:$0xff]
      %v455 = vld [vmem:[%s2] sm:$0x1]
      %v457 = vlaneseq
      %v458 = vshrl.u32 %v457, 7
      %v459 = vsub.s32 0, %v458
      %v460 = vrot.slane %v455, %v459
      %v462 = vmul.f32 %v439, %v460
      %v463 = vmul.f32 %v440, %v460
      %v464 = vmul.f32 %v441, %v460
      %v465 = vmul.f32 %v442, %v460
      %v466 = vmul.f32 %v443, %v460
      %v467 = vmul.f32 %v444, %v460
      %v468 = vmul.f32 %v445, %v460
      %v469 = vmul.f32 %v446, %v460
      %v470 = vmul.f32 %v447, %v460
      %v471 = vmul.f32 %v448, %v460
      %v472 = vmul.f32 %v449, %v460
      %v473 = vmul.f32 %v450, %v460
      %v474 = vmul.f32 %v451, %v460
      %v475 = vmul.f32 %v452, %v460
      %v476 = vmul.f32 %v453, %v460
      %v477 = vmul.f32 %v454, %v460
      %v478 = vld [vmem:[%s3] sm:$0x1]
      %v480 = vlaneseq
      %v481 = vshrl.u32 %v480, 7
      %v482 = vsub.s32 0, %v481
      %v483 = vrot.slane %v478, %v482
      %v485 = vadd.f32 %v462, %v483
      %v486 = vadd.f32 %v463, %v483
      %v487 = vadd.f32 %v464, %v483
      %v488 = vadd.f32 %v465, %v483
      %v489 = vadd.f32 %v466, %v483
      %v490 = vadd.f32 %v467, %v483
      %v491 = vadd.f32 %v468, %v483
      %v492 = vadd.f32 %v469, %v483
      %v493 = vadd.f32 %v470, %v483
      %v494 = vadd.f32 %v471, %v483
      %v495 = vadd.f32 %v472, %v483
      %v496 = vadd.f32 %v473, %v483
      %v497 = vadd.f32 %v474, %v483
      %v498 = vadd.f32 %v475, %v483
      %v499 = vadd.f32 %v476, %v483
      %v500 = vadd.f32 %v477, %v483
      %v501 = vmax.f32 %v485, 0.0
      %v502 = vmax.f32 %v486, 0.0
      %v503 = vmax.f32 %v487, 0.0
      %v504 = vmax.f32 %v488, 0.0
      %v505 = vmax.f32 %v489, 0.0
      %v506 = vmax.f32 %v490, 0.0
      %v507 = vmax.f32 %v491, 0.0
      %v508 = vmax.f32 %v492, 0.0
      %v509 = vmax.f32 %v493, 0.0
      %v510 = vmax.f32 %v494, 0.0
      %v511 = vmax.f32 %v495, 0.0
      %v512 = vmax.f32 %v496, 0.0
      %v513 = vmax.f32 %v497, 0.0
      %v514 = vmax.f32 %v498, 0.0
      %v515 = vmax.f32 %v499, 0.0
      %v516 = vmax.f32 %v500, 0.0
      %v517 = vpack.c.bf16 %v502, %v501
      %v518 = vpack.c.bf16 %v504, %v503
      %v519 = vpack.c.bf16 %v506, %v505
      %v520 = vpack.c.bf16 %v508, %v507
      %v521 = vpack.c.bf16 %v510, %v509
      %v522 = vpack.c.bf16 %v512, %v511
      %v523 = vpack.c.bf16 %v514, %v513
      %v524 = vpack.c.bf16 %v516, %v515
      %v533 = vunpack.c.l.b16 %v517
      %v534 = vunpack.c.h.b16 %v517
      %v535 = vunpack.c.l.b16 %v518
      %v536 = vunpack.c.h.b16 %v518
      %v537 = vunpack.c.l.b16 %v519
      %v538 = vunpack.c.h.b16 %v519
      %v539 = vunpack.c.l.b16 %v520
      %v540 = vunpack.c.h.b16 %v520
      %v541 = vunpack.c.l.b16 %v521
      %v542 = vunpack.c.h.b16 %v521
      %v543 = vunpack.c.l.b16 %v522
      %v544 = vunpack.c.h.b16 %v522
      %v545 = vunpack.c.l.b16 %v523
      %v546 = vunpack.c.h.b16 %v523
      %v547 = vunpack.c.l.b16 %v524
      %v548 = vunpack.c.h.b16 %v524
      %v549 = vpack.c.b16 %v533, %v533
      %v550 = vpack.c.b16 %v534, %v534
      %v551 = vpack.c.b16 %v535, %v535
      %v552 = vpack.c.b16 %v536, %v536
      %v553 = vpack.c.b16 %v537, %v537
      %v554 = vpack.c.b16 %v538, %v538
      %v555 = vpack.c.b16 %v539, %v539
      %v556 = vpack.c.b16 %v540, %v540
      %v557 = vpack.c.b16 %v541, %v541
      %v558 = vpack.c.b16 %v542, %v542
      %v559 = vpack.c.b16 %v543, %v543
      %v560 = vpack.c.b16 %v544, %v544
      %v561 = vpack.c.b16 %v545, %v545
      %v562 = vpack.c.b16 %v546, %v546
      %v563 = vpack.c.b16 %v547, %v547
      %v564 = vpack.c.b16 %v548, %v548
      %581 = vst [vmem:[#allocation8] sm:$0xf] %v549
      %582 = vst [vmem:[#allocation8 + $0x4] sm:$0xf] %v550
      %583 = vst [vmem:[#allocation8 + $0x8] sm:$0xf] %v551
      %584 = vst [vmem:[#allocation8 + $0xc] sm:$0xf] %v552
      %585 = vst [vmem:[#allocation8 + $0x10] sm:$0xf] %v553
      %586 = vst [vmem:[#allocation8 + $0x14] sm:$0xf] %v554
      %587 = vst [vmem:[#allocation8 + $0x18] sm:$0xf] %v555
      %588 = vst [vmem:[#allocation8 + $0x1c] sm:$0xf] %v556
      %589 = vst [vmem:[#allocation8 + $0x20] sm:$0xf] %v557
      %590 = vst [vmem:[#allocation8 + $0x24] sm:$0xf] %v558
      %591 = vst [vmem:[#allocation8 + $0x28] sm:$0xf] %v559
      %592 = vst [vmem:[#allocation8 + $0x2c] sm:$0xf] %v560
      %593 = vst [vmem:[#allocation8 + $0x30] sm:$0xf] %v561
      %594 = vst [vmem:[#allocation8 + $0x34] sm:$0xf] %v562
      %595 = vst [vmem:[#allocation8 + $0x38] sm:$0xf] %v563
      %596 = vst [vmem:[#allocation8 + $0x3c] sm:$0xf] %v564
    $region33: #{tpu_custom_call.1} parent=1 // pred_fallthru
      _
    // Predicated region
    $region34: #{tpu_custom_call.1} parent=1 // pred_check
      _
    $region35: #{tpu_custom_call.1} parent=1 // pred_check_branch
      %598 = sbr.rel (0) target = $region37
    $region36: #{tpu_custom_call.1} parent=1 // pred_region
      %s600 = ssub.s32 1024, 1024
      %601 = vsyncadd [#allocation5], %s600
      %s602 = sshll.u32 [#allocation8], 4
      %s603 = int_to_ptr.vmem [resolvable:$true] %s602
      %608 = dma.vmem_to_hbm [thread:$0]  %s603, 1024, %s4, [#allocation5], 64, 64, 4
    $region37: #{tpu_custom_call.1} parent=1 // pred_fallthru
      _
    // Predicated region
    $region38: #{tpu_custom_call.1} parent=1 // pred_check
      _
    $region39: #{tpu_custom_call.1} parent=1 // pred_check_branch
      %610 = sbr.rel (0) target = $region41
    $region40: #{tpu_custom_call.1} parent=1 // pred_region
      %611 = dma.done [#allocation5], 1024
    $region41: #{tpu_custom_call.1} parent=1 // pred_fallthru
      _
    %612 = vsyncpa [#allocation4], 1
    %613 = vsyncpa [#allocation7], 1
    %614 = vsyncpa [#allocation5], 1

</llo_original>
